<compile_context>
chip_gen: v5e
topology: v5e:2x2
jax: 0.10.0
libtpu: 0.0.40
codegen_flags: <defaults>
</compile_context>

<pallas_src>
import functools

import jax
import jax.numpy as jnp
from jax.experimental import pallas as pl
from jax.experimental.pallas import tpu as pltpu


def _exp_temperature_kernel(temp_ref, out_ref):
    # temp_ref: (1,) f32 in SMEM (scalar path, no VMEM input DMA).
    # out_ref : (1, 1) f32 in VMEM.
    # Splat the SMEM scalar to a (1,1) vector first so exp lowers to the EUP.
    t = temp_ref[0]
    out_ref[...] = jnp.exp(jnp.full((1, 1), t, dtype=jnp.float32))


def init_temperature_param(initial_temperature: float = 0.07) -> jax.Array:
    """Build the parameter once, already in the layout forward() consumes."""
    return jnp.full((1,), initial_temperature, dtype=jnp.float32)


@functools.partial(jax.jit)
def learnable_temperature_forward(temperature_param: jax.Array) -> jax.Array:
    """Compute exp(temperature) with a Pallas kernel.

    Args:
      temperature_param: shape (1,) float32 parameter (see init_temperature_param).

    Returns:
      0-d float32 array equal to exp(temperature_param[0]) (always positive).
    """
    out_2d = pl.pallas_call(
        _exp_temperature_kernel,
        out_shape=jax.ShapeDtypeStruct((1, 1), jnp.float32),
        in_specs=[pl.BlockSpec(memory_space=pltpu.MemorySpace.SMEM)],
        out_specs=pl.BlockSpec(memory_space=pltpu.MemorySpace.VMEM),
        cost_estimate=pl.CostEstimate(
            flops=0, transcendentals=1, bytes_accessed=8
        ),
    )(temperature_param)

    # torch.exp(nn.Parameter(scalar)) is a 0-d tensor -> return a true 0-d.
    # Under jit this slice is a free layout op fused with the pallas_call.
    return out_2d[0, 0]


if __name__ == "__main__":
    # Deterministic parameter init, mirroring nn.Parameter(torch.tensor(0.07)).
    # (PRNGKey(0) created per harness convention; the parameter itself is
    # deterministic by construction.)
    _ = jax.random.PRNGKey(0)
    temperature_param = init_temperature_param(0.07)

    result = learnable_temperature_forward(temperature_param)
    jax.block_until_ready(result)

    expected = jnp.exp(temperature_param[0])
    assert result.shape == ()
    assert result.dtype == jnp.float32
    assert jnp.allclose(result, expected, rtol=1e-6, atol=1e-6)
    assert float(result) > 0.0  # temperature must be positive

    print("KERNEL_OK")
</pallas_src>

<mosaic_0001>
module attributes {stable_mosaic.version = 11 : i64} {
  func.func @_exp_temperature_kernel(%arg0: memref<1xf32, #tpu.memory_space<smem>>, %arg1: memref<1x1xf32, #tpu.memory_space<vmem>>) attributes {dimension_semantics = [], scalar_prefetch = 0 : i64, scratch_operands = 0 : i64, tpu.core_type = #tpu.core_type<tc>} {
    %c0 = arith.constant 0 : index
    %0 = memref.load %arg0[%c0] : memref<1xf32, #tpu.memory_space<smem>>
    %1 = vector.broadcast %0 : f32 to vector<1x1xf32>
    %2 = math.exp %1 : vector<1x1xf32>
    %c0_0 = arith.constant 0 : index
    %c0_1 = arith.constant 0 : index
    %3 = vector.load %arg1[%c0_0, %c0_1] : memref<1x1xf32, #tpu.memory_space<vmem>>, vector<1x1xf32>
    tpu.vector_store %arg1[%c0_0, %c0_1], %2 {strides = array<i32>} : memref<1x1xf32, #tpu.memory_space<vmem>>, vector<1x1xf32>,
    return
  }
}

</mosaic_0001>

<llo_original>
// kernel: learnable_temperature_forward.1
$region0: #{learnable_temperature_forward.1}
  #allocation0 [shape = 'u32[]', space=smem, size = 0x4, offset = 0x4, fixed_abs, tag = 'smem constant byte address 0x4 - core index']
  #allocation1 [shape = 'u32[72,128]{1,0:T(1,128)}', space=vmem, size = 0x9000, scoped, tag = 'internal scratch']
  #allocation2 [shape = 'f32[1]{0:T(128)S(6)}', space=smem, size = 0x200, scoped, tag = 'scoped memory for learnable_temperature_forward.1']
  %s0 = inlined_call_operand.<no memory space> [shape: f32[1], index: 0, kind: input, shape index: {}]
  %s1 = inlined_call_operand.hbm [shape: f32[1,1], index: 1, kind: output, shape index: {}]
  %s2 = sld [smem:[#allocation0]]
  $region14: #{learnable_temperature_forward.1} parent=0
    _
  %s4 = ssub.s32 1, %s2
  %s5 = scalar_select 0, %s4, %s2
  %6 = sst [smem:[#allocation2]] %s0
  $region1: #{learnable_temperature_forward.1} parent=0
    #allocation3 [shape = 'u8[512]{0}', space=vmem, size = 0x400, scoped, tag = 'output window, operand 0, single buffered']
    #allocation4 [shape = 's32[1]{0}', space=sflag, size = 0x4, scoped, tag = 'scoped memory for learnable_temperature_forward.1']
    %7 = vsyncpa [#allocation4], 0
    // Predicated region
    $region2: #{learnable_temperature_forward.1} parent=1 // pred_check
      _
    $region3: #{learnable_temperature_forward.1} parent=1 // pred_check_branch
      %9 = sbr.rel (0) target = $region5
    $region4: #{learnable_temperature_forward.1} parent=1 // pred_region
      _
    $region5: #{learnable_temperature_forward.1} parent=1 // pred_fallthru
      _
    %s10 = sld [smem:[#allocation2]]
    %v11 = vstv %s10
    %v12 = vmul.f32 %v11, 1.442695
    %v13 = vpow.pop %v12
    %vm14 = vcmask 0
    %15 = vst.msk [vmem:[#allocation3] sm:$0x1] %vm14, %v13
    // Predicated region
    $region6: #{learnable_temperature_forward.1} parent=1 // pred_check
      _
    $region7: #{learnable_temperature_forward.1} parent=1 // pred_check_branch
      %17 = sbr.rel (0) target = $region9
    $region8: #{learnable_temperature_forward.1} parent=1 // pred_region
      %19 = vsyncadd [#allocation4], 0
      %s21 = sshll.u32 [#allocation3], 4
      %s22 = int_to_ptr.vmem [resolvable:$true] %s21
      %s23 = sshll.u32 %s1, 4
      %s24 = int_to_ptr.hbm [resolvable:$true] %s23
      %26 = dma.vmem_to_hbm [thread:$0]  %s22, 16, %s24, [#allocation4]
    $region9: #{learnable_temperature_forward.1} parent=1 // pred_fallthru
      _
    // Predicated region
    $region10: #{learnable_temperature_forward.1} parent=1 // pred_check
      _
    $region11: #{learnable_temperature_forward.1} parent=1 // pred_check_branch
      %28 = sbr.rel (0) target = $region13
    $region12: #{learnable_temperature_forward.1} parent=1 // pred_region
      %30 = dma.done [#allocation4], 16
    $region13: #{learnable_temperature_forward.1} parent=1 // pred_fallthru
      _
    %31 = vsyncpa [#allocation4], 1

</llo_original>
